<compile_context>
chip_gen: v6e
topology: v6e:2x2x1
jax: 0.10.0
libtpu: 0.0.40
codegen_flags: <defaults>
</compile_context>

<pallas_src>
import functools

import jax
import jax.numpy as jnp
from jax.experimental import pallas as pl
from jax.experimental.pallas import tpu as pltpu


def _round_up(x, m):
    return -(-x // m) * m


def patch_embed_kernel(tok_ref, w_ref, addp_ref, cls_ref, o_ref):
    # tok_ref:  [1, ipb*N, P]  (bf16)  streamed, double-buffered
    # w_ref:    [P, E]         (bf16)  resident (constant block index)
    # addp_ref: [N, E]         (f32)   resident: bias + pos_enc[1:]
    # cls_ref:  [1, E]         (f32)   resident: class_token + pos_enc[0]
    # o_ref:    [1, ipb, T, E]         streamed, double-buffered
    ipb, t, e = o_ref.shape[1], o_ref.shape[2], o_ref.shape[3]
    n = t - 1

    # One aligned MXU matmul over all images in this step, f32 accumulation.
    y = jnp.dot(tok_ref[0], w_ref[...], preferred_element_type=jnp.float32)
    # Split rows per image; layout-free when N % 8 == 0 (square ViT grids).
    y = y.reshape(ipb, n, e) + addp_ref[...][None]                  # + (bias + pos[1:])

    # Patch tokens go to rows 1..N of each image's output slab.
    o_ref[0, :, pl.ds(1, n), :] = y.astype(o_ref.dtype)
    # Class row (zero-input row of the linear): class_token + pos[0].
    cls = jnp.broadcast_to(cls_ref[...][None], (ipb, 1, e))
    o_ref[0, :, pl.ds(0, 1), :] = cls.astype(o_ref.dtype)


def _choose_imgs_per_block(B, N, T, P, E, tok_itemsize, out_itemsize,
                           vmem_budget_bytes, max_rows=2048):
    """Largest divisor of B whose per-step footprint fits the VMEM budget,
    preferring 8-sublane-aligned matmul row counts and keeping G >= 2."""
    e_pad = _round_up(E, 128)
    # Resident operands, conservatively counted as double-buffered.
    fixed = (2 * _round_up(P, 8) * e_pad * tok_itemsize
             + 2 * _round_up(N, 8) * e_pad * 4
             + 2 * 8 * e_pad * 4)

    def fits(d):
        per_step = (2 * _round_up(d * N, 8) * _round_up(P, 128) * tok_itemsize
                    + 2 * d * _round_up(T, 8) * e_pad * out_itemsize)
        return fixed + per_step <= vmem_budget_bytes

    best, best_aligned = 1, None
    for d in range(1, B + 1):
        if B % d:
            continue
        if B >= 2 and B // d < 2:     # keep >= 2 grid steps (v7x 2-TC sharding)
            continue
        if d * N > max_rows or not fits(d):
            continue
        best = max(best, d)
        if (d * N) % 8 == 0:
            best_aligned = d if best_aligned is None else max(best_aligned, d)
    return best_aligned if best_aligned is not None else best


def patch_embedding(x, weight, bias, class_token, pos_enc, *, patch_size,
                    imgs_per_block=None, out_dtype=None):
    """Forward pass of the PyTorch PatchEmbedding module.

    x:           [B, C, H, W]
    weight:      [E, P]   (PyTorch nn.Linear weight, P = patch_size**2 * C)
    bias:        [E]
    class_token: [1, 1, P]
    pos_enc:     [N + 1, P]   (N = (H // patch_size) * (W // patch_size))
    returns:     [B, N + 1, E]
    """
    B, C, H, W = x.shape
    assert H % patch_size == 0 and W % patch_size == 0
    gh, gw = H // patch_size, W // patch_size
    N = gh * gw
    T = N + 1
    P = patch_size * patch_size * C
    E = weight.shape[0]
    # The original module only type-checks when embedding_dim == P (cat + pos add).
    assert E == P, "PatchEmbedding requires embedding_dim == patch_size**2 * in_channels"
    assert pos_enc.shape == (T, E)

    out_dtype = x.dtype if out_dtype is None else out_dtype
    stream_dtype = jnp.bfloat16        # MXU-native; halves HBM traffic of the streams

    # --- einops rearrange (pure data movement, stays in XLA) ------------------
    # 'b c (h1 h2) (w1 w2) -> b (h2 w2) (h1 w1 c)', h1 = w1 = patch_size (outer factors)
    xr = x.astype(stream_dtype).reshape(B, C, patch_size, gh, patch_size, gw)
    patches = xr.transpose(0, 3, 5, 2, 4, 1).reshape(B, N, P)        # [B, N, P] bf16

    w_t = weight.T.astype(stream_dtype)                              # [P, E] bf16

    # Additive tensors stay f32 and are applied after the f32 accumulation.
    addp = (pos_enc[1:] + bias[None, :]).astype(jnp.float32)         # [N, E]
    cls = (pos_enc[0:1] + class_token.reshape(1, E)).astype(jnp.float32)   # [1, E]

    # --- tile sizing against an explicit VMEM budget ---------------------------
    # Budget sized for v7x (64 MiB physical VMEM) with headroom; v5e/v6e have
    # 128 MiB so the same setting is safe everywhere.  The scoped limit is
    # raised above v5e's 16 MiB / v6e's 32 MiB defaults.
    vmem_limit = 48 * 1024 * 1024
    vmem_budget = 36 * 1024 * 1024
    if imgs_per_block is None:
        imgs_per_block = _choose_imgs_per_block(
            B, N, T, P, E,
            tok_itemsize=jnp.dtype(stream_dtype).itemsize,
            out_itemsize=jnp.dtype(out_dtype).itemsize,
            vmem_budget_bytes=vmem_budget)
    # TODO(synk): support batch sizes without a good divisor via pl.cdiv grid + padded tail block.
    assert B % imgs_per_block == 0
    G = B // imgs_per_block
    rows = imgs_per_block * N

    tokens_g = patches.reshape(G, rows, P)            # contiguous reshape (free)

    bytes_accessed = (tokens_g.size * tokens_g.dtype.itemsize
                      + w_t.size * w_t.dtype.itemsize
                      + (addp.size + cls.size) * 4
                      + B * T * E * jnp.dtype(out_dtype).itemsize)
    cost = pl.CostEstimate(flops=2 * B * N * P * E, transcendentals=0,
                           bytes_accessed=bytes_accessed)

    out = pl.pallas_call(
        patch_embed_kernel,
        out_shape=jax.ShapeDtypeStruct((G, imgs_per_block, T, E), out_dtype),
        grid=(G,),
        in_specs=[
            pl.BlockSpec((1, rows, P), lambda i: (i, 0, 0)),   # patches: streamed
            pl.BlockSpec((P, E), lambda i: (0, 0)),            # weight: resident
            pl.BlockSpec((N, E), lambda i: (0, 0)),            # bias + pos[1:]: resident
            pl.BlockSpec((1, E), lambda i: (0, 0)),            # class + pos[0]: resident
        ],
        out_specs=pl.BlockSpec((1, imgs_per_block, T, E), lambda i: (i, 0, 0, 0)),
        compiler_params=pltpu.CompilerParams(
            dimension_semantics=("parallel",),
            vmem_limit_bytes=vmem_limit),
        cost_estimate=cost,
    )(tokens_g, w_t, addp, cls)

    return out.reshape(B, T, E)


def patch_embedding_reference(x, weight, bias, class_token, pos_enc, *, patch_size):
    """Pure-JAX f32 reference mirroring the PyTorch forward."""
    B, C, H, W = x.shape
    gh, gw = H // patch_size, W // patch_size
    xr = x.reshape(B, C, patch_size, gh, patch_size, gw).transpose(0, 3, 5, 2, 4, 1)
    patches = xr.reshape(B, gh * gw, patch_size * patch_size * C)
    y = jnp.einsum("bnp,ep->bne", patches, weight,
                   precision=jax.lax.Precision.HIGHEST) + bias
    cls = jnp.broadcast_to(class_token, (B, 1, class_token.shape[-1]))
    y = jnp.concatenate([cls, y], axis=1)
    return y + pos_enc[None]


if __name__ == "__main__":
    # Small config consistent with the module (embedding_dim must equal
    # patch_size**2 * in_channels for the cat + positional add to type-check).
    batch_size, in_channels, img_size, patch_size = 8, 3, 32, 8
    P = patch_size * patch_size * in_channels          # 192
    embedding_dim = P                                  # 192 (module default)
    N = (img_size // patch_size) ** 2                  # 16

    key = jax.random.PRNGKey(0)
    kx, kw, kb, kc, kp = jax.random.split(key, 5)

    bound = 1.0 / (P ** 0.5)
    weight = jax.random.uniform(kw, (embedding_dim, P), jnp.float32, -bound, bound)
    bias = jax.random.uniform(kb, (embedding_dim,), jnp.float32, -bound, bound)
    class_token = jax.random.normal(kc, (1, 1, P), jnp.float32)
    pos_enc = jax.random.normal(kp, (N + 1, P), jnp.float32)
    x = jax.random.normal(kx, (batch_size, in_channels, img_size, img_size), jnp.float32)

    fwd = jax.jit(functools.partial(patch_embedding, patch_size=patch_size))
    out = fwd(x, weight, bias, class_token, pos_enc)
    jax.block_until_ready(out)

    ref = patch_embedding_reference(x, weight, bias, class_token, pos_enc,
                                    patch_size=patch_size)
    assert out.shape == (batch_size, N + 1, embedding_dim)
    max_err = float(jnp.max(jnp.abs(out - ref)))
    # bf16-streamed MXU matmul (f32 accumulate) vs f32 HIGHEST reference.
    assert jnp.allclose(out, ref, atol=5e-2, rtol=5e-2), max_err
    print("KERNEL_OK")
</pallas_src>

<mosaic_0001>
module attributes {stable_mosaic.version = 11 : i64} {
  func.func @patch_embed_kernel(%arg0: i32, %arg1: memref<1x64x192xbf16, #tpu.memory_space<vmem>>, %arg2: memref<192x192xbf16, #tpu.memory_space<vmem>>, %arg3: memref<16x192xf32, #tpu.memory_space<vmem>>, %arg4: memref<1x192xf32, #tpu.memory_space<vmem>>, %arg5: memref<1x4x17x192xf32, #tpu.memory_space<vmem>>) attributes {dimension_semantics = [#tpu.dimension_semantics<parallel>], iteration_bounds = array<i64: 2>, scalar_prefetch = 0 : i64, scratch_operands = 0 : i64, tpu.core_type = #tpu.core_type<tc>, window_params = [{transform_indices = @transform_0, window_bounds = array<i64: 1, 64, 192>}, {pipeline_mode = #tpu.pipeline_mode<synchronous>, transform_indices = @transform_1, window_bounds = array<i64: 192, 192>}, {pipeline_mode = #tpu.pipeline_mode<synchronous>, transform_indices = @transform_2, window_bounds = array<i64: 16, 192>}, {pipeline_mode = #tpu.pipeline_mode<synchronous>, transform_indices = @transform_3, window_bounds = array<i64: 1, 192>}, {transform_indices = @transform_4, window_bounds = array<i64: 1, 4, 17, 192>}]} {
    %c0 = arith.constant 0 : index
    %c0_0 = arith.constant 0 : index
    %c0_1 = arith.constant 0 : index
    %0 = vector.load %arg1[%c0, %c0_0, %c0_1] : memref<1x64x192xbf16, #tpu.memory_space<vmem>>, vector<1x64x192xbf16>
    %1 = vector.shape_cast %0 : vector<1x64x192xbf16> to vector<64x192xbf16>
    %c0_2 = arith.constant 0 : index
    %c0_3 = arith.constant 0 : index
    %2 = vector.load %arg2[%c0_2, %c0_3] : memref<192x192xbf16, #tpu.memory_space<vmem>>, vector<192x192xbf16>
    %cst = arith.constant dense<0.000000e+00> : vector<64x192xf32>
    %3 = tpu.matmul %1, %2, %cst {dimension_numbers = #tpu.dot_dimension_numbers<[1], [0], [0], [1], [0, 0, 1, 1], [], []>} : vector<64x192xbf16>, vector<192x192xbf16>, vector<64x192xf32> -> vector<64x192xf32>
    %4 = vector.shape_cast %3 : vector<64x192xf32> to vector<4x16x192xf32>
    %c0_4 = arith.constant 0 : index
    %c0_5 = arith.constant 0 : index
    %5 = vector.load %arg3[%c0_4, %c0_5] : memref<16x192xf32, #tpu.memory_space<vmem>>, vector<16x192xf32>
    %6 = vector.shape_cast %5 : vector<16x192xf32> to vector<1x16x192xf32>
    %7 = vector.broadcast %6 : vector<1x16x192xf32> to vector<4x16x192xf32>
    %8 = arith.addf %4, %7 : vector<4x16x192xf32>
    %c0_6 = arith.constant 0 : index
    %c0_7 = arith.constant 0 : index
    %c1 = arith.constant 1 : index
    %c0_8 = arith.constant 0 : index
    %9 = vector.load %arg5[%c0_6, %c0_7, %c1, %c0_8] : memref<1x4x17x192xf32, #tpu.memory_space<vmem>>, vector<1x4x16x192xf32>
    %10 = vector.shape_cast %9 : vector<1x4x16x192xf32> to vector<4x16x192xf32>
    %11 = vector.shape_cast %8 : vector<4x16x192xf32> to vector<1x4x16x192xf32>
    tpu.vector_store %arg5[%c0_6, %c0_7, %c1, %c0_8], %11 {strides = array<i32>} : memref<1x4x17x192xf32, #tpu.memory_space<vmem>>, vector<1x4x16x192xf32>,
    %c0_9 = arith.constant 0 : index
    %c0_10 = arith.constant 0 : index
    %12 = vector.load %arg4[%c0_9, %c0_10] : memref<1x192xf32, #tpu.memory_space<vmem>>, vector<1x192xf32>
    %13 = vector.shape_cast %12 : vector<1x192xf32> to vector<1x1x192xf32>
    %14 = vector.shape_cast %13 : vector<1x1x192xf32> to vector<1x1x192xf32>
    %15 = vector.broadcast %14 : vector<1x1x192xf32> to vector<4x1x192xf32>
    %c0_11 = arith.constant 0 : index
    %c0_12 = arith.constant 0 : index
    %c0_13 = arith.constant 0 : index
    %c0_14 = arith.constant 0 : index
    %16 = vector.load %arg5[%c0_11, %c0_12, %c0_13, %c0_14] : memref<1x4x17x192xf32, #tpu.memory_space<vmem>>, vector<1x4x1x192xf32>
    %17 = vector.shape_cast %16 : vector<1x4x1x192xf32> to vector<4x1x192xf32>
    %18 = vector.shape_cast %15 : vector<4x1x192xf32> to vector<1x4x1x192xf32>
    tpu.vector_store %arg5[%c0_11, %c0_12, %c0_13, %c0_14], %18 {strides = array<i32>} : memref<1x4x17x192xf32, #tpu.memory_space<vmem>>, vector<1x4x1x192xf32>,
    return
  }
  func.func @transform_0(%arg0: i32) -> (i32, i32, i32) {
    %c0_i32 = arith.constant 0 : i32
    %c0_i32_0 = arith.constant 0 : i32
    %c0_i32_1 = arith.constant 0 : i32
    return %arg0, %c0_i32, %c0_i32_0 : i32, i32, i32
  }
  func.func @transform_1(%arg0: i32) -> (i32, i32) {
    %c0_i32 = arith.constant 0 : i32
    %c0_i32_0 = arith.constant 0 : i32
    %c0_i32_1 = arith.constant 0 : i32
    return %c0_i32, %c0_i32_0 : i32, i32
  }
  func.func @transform_2(%arg0: i32) -> (i32, i32) {
    %c0_i32 = arith.constant 0 : i32
    %c0_i32_0 = arith.constant 0 : i32
    %c0_i32_1 = arith.constant 0 : i32
    return %c0_i32, %c0_i32_0 : i32, i32
  }
  func.func @transform_3(%arg0: i32) -> (i32, i32) {
    %c0_i32 = arith.constant 0 : i32
    %c0_i32_0 = arith.constant 0 : i32
    %c0_i32_1 = arith.constant 0 : i32
    return %c0_i32, %c0_i32_0 : i32, i32
  }
  func.func @transform_4(%arg0: i32) -> (i32, i32, i32, i32) {
    %c0_i32 = arith.constant 0 : i32
    %c0_i32_0 = arith.constant 0 : i32
    %c0_i32_1 = arith.constant 0 : i32
    %c0_i32_2 = arith.constant 0 : i32
    return %arg0, %c0_i32, %c0_i32_0, %c0_i32_1 : i32, i32, i32, i32
  }
}

</mosaic_0001>

<llo_original>
// kernel: patch_embedding.1
$region0: #{patch_embedding.1}
  #allocation0 [shape = 'u32[]', space=smem, size = 0x4, offset = 0x4, fixed_abs, tag = 'smem constant byte address 0x4 - core index']
  #allocation1 [shape = 'u32[144,128]{1,0:T(1,128)}', space=vmem, size = 0x12000, scoped, tag = 'internal scratch']
  %s0 = inlined_call_operand.vmem [shape: bf16[2,64,192], index: 0, kind: input, shape index: {}]
  %s1 = inlined_call_operand.vmem [shape: bf16[192,192], index: 1, kind: input, shape index: {}]
  %s2 = inlined_call_operand.vmem [shape: f32[16,192], index: 2, kind: input, shape index: {}]
  %s3 = inlined_call_operand.vmem [shape: f32[1,192], index: 3, kind: input, shape index: {}]
  %s4 = inlined_call_operand.vmem [shape: f32[2,4,17,192], index: 4, kind: output, shape index: {}]
  %s5 = sld [smem:[#allocation0]]
  $region49: #{patch_embedding.1} parent=0
    _
  %s7 = ssub.s32 1, %s5
  %s8 = scalar_select 0, %s7, %s5
  loop: start=0, step=1, limit=4
  $region2: #{patch_embedding.1} parent=0 // loop_pre_header
    _
  $region3: #{patch_embedding.1} parent=0 // loop_header
    %s10 = sphi 0, %s14
    %p11 = scmp.ge.s32.totalorder %s10, 4
    %s20 = sphi 0, %s22
    %s23 = sphi 0, %s20
    %s24 = sphi 0, %s23
    %s40 = sphi 0, %s24
    %s44 = sphi 0, %s44
    %s46 = sphi 0, %s44
    %s47 = sphi 0, %s46
    %s61 = sphi 0, %s47
    %s65 = sphi 0, %s65
    %s67 = sphi 0, %s65
    %s68 = sphi 0, %s67
    %s82 = sphi 0, %s68
    %s86 = sphi 0, %s86
    %s88 = sphi 0, %s86
    %s89 = sphi 0, %s88
    %s103 = sphi 0, %s89
    %s109 = sphi 0, %s111
    %s112 = sphi 0, %s109
    %s113 = sphi 0, %s112
    %s129 = sphi 0, %s113
  $region4: #{patch_embedding.1} parent=0 // loop_header_branch
    %13 = sbr.rel (%p11) target = $region8
  $region5: #{patch_embedding.1} parent=0 // loop_body
    %s15 = ssub.s32 %s10, 1
    %s16 = ssub.s32 %s10, 2
    %s17 = sadd.s32 %s10, 1
    %s18 = ssub.s32 %s10, %s17
    %p19 = scmp.eq.s32.totalorder %s18, 0
    %s21 = sadd.s32 %s20, 1
    %s22 = scalar_select %p19, %s20, %s21
    %p25 = pneg %p19
    %p26 = scmp.eq.s32.totalorder %s10, 1
    %p27 = por %p25, %p26
    %p28 = scmp.ne.s32.totalorder %s20, %s23
    %p29 = scmp.eq.s32.totalorder %s10, 0
    %p30 = por %p28, %p29
    %p31 = scmp.ne.s32.totalorder %s20, %s23
    %p32 = scmp.eq.s32.totalorder %s15, 1
    %p33 = por %p31, %p32
    %p34 = scmp.ne.s32.totalorder %s23, %s24
    %p35 = scmp.eq.s32.totalorder %s15, 0
    %p36 = por %p34, %p35
    %p37 = scmp.ne.s32.totalorder %s23, %s24
    %p38 = scmp.eq.s32.totalorder %s16, 1
    %p39 = por %p37, %p38
    %p41 = scmp.ne.s32.totalorder %s24, %s40
    %p42 = scmp.eq.s32.totalorder %s16, 0
    %p43 = por %p41, %p42
    %s45 = sadd.s32 %s44, 1
    %p48 = scmp.eq.s32.totalorder %s10, 1
    %p49 = scmp.ne.s32.totalorder %s44, %s46
    %p50 = scmp.eq.s32.totalorder %s10, 0
    %p51 = por %p49, %p50
    %p52 = scmp.ne.s32.totalorder %s44, %s46
    %p53 = scmp.eq.s32.totalorder %s15, 1
    %p54 = por %p52, %p53
    %p55 = scmp.ne.s32.totalorder %s46, %s47
    %p56 = scmp.eq.s32.totalorder %s15, 0
    %p57 = por %p55, %p56
    %p58 = scmp.ne.s32.totalorder %s46, %s47
    %p59 = scmp.eq.s32.totalorder %s16, 1
    %p60 = por %p58, %p59
    %p62 = scmp.ne.s32.totalorder %s47, %s61
    %p63 = scmp.eq.s32.totalorder %s16, 0
    %p64 = por %p62, %p63
    %s66 = sadd.s32 %s65, 1
    %p69 = scmp.eq.s32.totalorder %s10, 1
    %p70 = scmp.ne.s32.totalorder %s65, %s67
    %p71 = scmp.eq.s32.totalorder %s10, 0
    %p72 = por %p70, %p71
    %p73 = scmp.ne.s32.totalorder %s65, %s67
    %p74 = scmp.eq.s32.totalorder %s15, 1
    %p75 = por %p73, %p74
    %p76 = scmp.ne.s32.totalorder %s67, %s68
    %p77 = scmp.eq.s32.totalorder %s15, 0
    %p78 = por %p76, %p77
    %p79 = scmp.ne.s32.totalorder %s67, %s68
    %p80 = scmp.eq.s32.totalorder %s16, 1
    %p81 = por %p79, %p80
    %p83 = scmp.ne.s32.totalorder %s68, %s82
    %p84 = scmp.eq.s32.totalorder %s16, 0
    %p85 = por %p83, %p84
    %s87 = sadd.s32 %s86, 1
    %p90 = scmp.eq.s32.totalorder %s10, 1
    %p91 = scmp.ne.s32.totalorder %s86, %s88
    %p92 = scmp.eq.s32.totalorder %s10, 0
    %p93 = por %p91, %p92
    %p94 = scmp.ne.s32.totalorder %s86, %s88
    %p95 = scmp.eq.s32.totalorder %s15, 1
    %p96 = por %p94, %p95
    %p97 = scmp.ne.s32.totalorder %s88, %s89
    %p98 = scmp.eq.s32.totalorder %s15, 0
    %p99 = por %p97, %p98
    %p100 = scmp.ne.s32.totalorder %s88, %s89
    %p101 = scmp.eq.s32.totalorder %s16, 1
    %p102 = por %p100, %p101
    %p104 = scmp.ne.s32.totalorder %s89, %s103
    %p105 = scmp.eq.s32.totalorder %s16, 0
    %p106 = por %p104, %p105
    %s107 = ssub.s32 %s10, %s17
    %p108 = scmp.eq.s32.totalorder %s107, 0
    %s110 = sadd.s32 %s109, 1
    %s111 = scalar_select %p108, %s109, %s110
    %p114 = pneg %p108
    %p115 = scmp.eq.s32.totalorder %s10, 1
    %p116 = por %p114, %p115
    %p117 = scmp.ne.s32.totalorder %s109, %s112
    %p118 = scmp.eq.s32.totalorder %s10, 0
    %p119 = por %p117, %p118
    %p120 = scmp.ne.s32.totalorder %s109, %s112
    %p121 = scmp.eq.s32.totalorder %s15, 1
    %p122 = por %p120, %p121
    %p123 = scmp.ne.s32.totalorder %s112, %s113
    %p124 = scmp.eq.s32.totalorder %s15, 0
    %p125 = por %p123, %p124
    %p126 = scmp.ne.s32.totalorder %s112, %s113
    %p127 = scmp.eq.s32.totalorder %s16, 1
    %p128 = por %p126, %p127
    %p130 = scmp.ne.s32.totalorder %s113, %s129
    %p131 = scmp.eq.s32.totalorder %s16, 0
    %p132 = por %p130, %p131
    %p133 = scmp.le.s32.totalorder 1, %s10
    %p134 = scmp.lt.s32.totalorder %s10, 3
    %p135 = pnand %p133, %p134
    %p136 = pneg %p135
    // Predicated region
    $region9: #{patch_embedding.1} parent=5 // pred_check
      _
    $region10: #{patch_embedding.1} parent=5 // pred_check_branch
      %138 = sbr.rel (%p135) target = $region12
    $region11: #{patch_embedding.1} parent=5 // pred_region
      %s139 = ssub.s32 %s10, 1
      // Predicated region
      $region13: #{patch_embedding.1} parent=11 // pred_check
        %p140 = pneg %p57
      $region14: #{patch_embedding.1} parent=11 // pred_check_branch
        %142 = sbr.rel (%p140) target = $region16
      $region15: #{patch_embedding.1} parent=11 // pred_region
        _
      $region16: #{patch_embedding.1} parent=11 // pred_fallthru
        _
      // Predicated region
      $region17: #{patch_embedding.1} parent=11 // pred_check
        %p143 = pneg %p78
      $region18: #{patch_embedding.1} parent=11 // pred_check_branch
        %145 = sbr.rel (%p143) target = $region20
      $region19: #{patch_embedding.1} parent=11 // pred_region
        _
      $region20: #{patch_embedding.1} parent=11 // pred_fallthru
        _
      // Predicated region
      $region21: #{patch_embedding.1} parent=11 // pred_check
        %p146 = pneg %p99
      $region22: #{patch_embedding.1} parent=11 // pred_check_branch
        %148 = sbr.rel (%p146) target = $region24
      $region23: #{patch_embedding.1} parent=11 // pred_region
        _
      $region24: #{patch_embedding.1} parent=11 // pred_fallthru
        _
    $region12: #{patch_embedding.1} parent=5 // pred_fallthru
      _
    %p149 = scmp.lt.s32.totalorder %s10, 2
    // Predicated region
    $region25: #{patch_embedding.1} parent=5 // pred_check
      %p150 = pneg %p149
    $region26: #{patch_embedding.1} parent=5 // pred_check_branch
      %152 = sbr.rel (%p150) target = $region28
    $region27: #{patch_embedding.1} parent=5 // pred_region
      // Predicated region
      $region29: #{patch_embedding.1} parent=27 // pred_check
        %p153 = pneg %p30
      $region30: #{patch_embedding.1} parent=27 // pred_check_branch
        %155 = sbr.rel (%p153) target = $region32
      $region31: #{patch_embedding.1} parent=27 // pred_region
        %p156 = scmp.lt.s32.totalorder %s10, 1
        %s157 = scalar_select %p156, %s10, 1
        %s158 = smul.addr %s157, 16
        %s159 = smul.addr %s158, 4
        %s160 = scalar_lea.vmem %s0, %s159
      $region32: #{patch_embedding.1} parent=27 // pred_fallthru
        _
    $region28: #{patch_embedding.1} parent=5 // pred_fallthru
      _
    %p161 = scmp.le.s32.totalorder 1, %s10
    %p162 = scmp.lt.s32.totalorder %s10, 3
    %p163 = pnand %p161, %p162
    %p164 = pneg %p163
    // Predicated region
    $region33: #{patch_embedding.1} parent=5 // pred_check
      _
    $region34: #{patch_embedding.1} parent=5 // pred_check_branch
      %166 = sbr.rel (%p163) target = $region36
    $region35: #{patch_embedding.1} parent=5 // pred_region
      %s167 = ssub.s32 %s10, 1
      %p168 = scmp.lt.s32.totalorder %s15, 1
      %s169 = scalar_select %p168, %s15, 1
      %s170 = smul.addr %s169, 16
      %s171 = smul.addr %s170, 4
      %s172 = scalar_lea.vmem %s0, %s171
      %p173 = pneg %p36
      %p174 = pneg %p33
      %p175 = pneg %p57
      %p176 = pneg %p54
      %p177 = pneg %p78
      %p178 = pneg %p75
      %p179 = pneg %p99
      %p180 = pneg %p96
      %p181 = pneg %p125
      %p182 = pneg %p122
      %p183 = scmp.lt.s32.totalorder %s15, 1
      %s184 = scalar_select %p183, %s15, 1
      %s185 = smul.addr %s184, 24
      %s186 = smul.addr %s185, 8
      %s187 = scalar_lea.vmem %s4, %s186
      %p188 = scmp.lt.s32.totalorder %s15, 1
      %s189 = scalar_select %p188, %s15, 1
      %s190 = smul.addr %s189, 16
      %s191 = smul.addr %s190, 4
      %s192 = scalar_lea.vmem %s0, %s191
      %p193 = scmp.lt.s32.totalorder %s15, 1
      %s194 = scalar_select %p193, %s15, 1
      %s195 = smul.addr %s194, 24
      %s196 = smul.addr %s195, 8
      %s197 = scalar_lea.vmem %s4, %s196
      %v199 = vld [vmem:[%s192] sm:$0xff]
      %v200 = vld [vmem:[%s192 + $0x8] sm:$0xff]
      %v201 = vld [vmem:[%s192 + $0x10] sm:$0xff]
      %v202 = vld [vmem:[%s192 + $0x18] sm:$0xff]
      %v203 = vld [vmem:[%s192 + $0x20] sm:$0xff]
      %v204 = vld [vmem:[%s192 + $0x28] sm:$0xff]
      %v205 = vld [vmem:[%s192 + $0x30] sm:$0xff]
      %v206 = vld [vmem:[%s192 + $0x38] sm:$0xff]
      %v207 = vld [vmem:[%s1] sm:$0xff]
      %v208 = vld [vmem:[%s1 + $0x8] sm:$0xff]
      %v209 = vld [vmem:[%s1 + $0x10] sm:$0xff]
      %v210 = vld [vmem:[%s1 + $0x18] sm:$0xff]
      %v211 = vld [vmem:[%s1 + $0x20] sm:$0xff]
      %v212 = vld [vmem:[%s1 + $0x28] sm:$0xff]
      %v213 = vld [vmem:[%s1 + $0x30] sm:$0xff]
      %v214 = vld [vmem:[%s1 + $0x38] sm:$0xff]
      %v215 = vld [vmem:[%s1 + $0x40] sm:$0xff]
      %v216 = vld [vmem:[%s1 + $0x48] sm:$0xff]
      %v217 = vld [vmem:[%s1 + $0x50] sm:$0xff]
      %v218 = vld [vmem:[%s1 + $0x58] sm:$0xff]
      %v219 = vld [vmem:[%s1 + $0x60] sm:$0xff]
      %v220 = vld [vmem:[%s1 + $0x68] sm:$0xff]
      %v221 = vld [vmem:[%s1 + $0x70] sm:$0xff]
      %v222 = vld [vmem:[%s1 + $0x78] sm:$0xff]
      %v223 = vld [vmem:[%s1 + $0x80] sm:$0xff]
      %v224 = vld [vmem:[%s1 + $0x88] sm:$0xff]
      %v225 = vld [vmem:[%s1 + $0x90] sm:$0xff]
      %v226 = vld [vmem:[%s1 + $0x98] sm:$0xff]
      %v227 = vld [vmem:[%s1 + $0xa0] sm:$0xff]
      %v228 = vld [vmem:[%s1 + $0xa8] sm:$0xff]
      %v229 = vld [vmem:[%s1 + $0xb0] sm:$0xff]
      %v230 = vld [vmem:[%s1 + $0xb8] sm:$0xff]
      %v239 = vunpack.c.l.b16 %v199
      %v240 = vunpack.c.h.b16 %v199
      %v241 = vunpack.c.l.b16 %v200
      %v242 = vunpack.c.h.b16 %v200
      %v243 = vunpack.c.l.b16 %v201
      %v244 = vunpack.c.h.b16 %v201
      %v245 = vunpack.c.l.b16 %v202
      %v246 = vunpack.c.h.b16 %v202
      %v247 = vunpack.c.l.b16 %v203
      %v248 = vunpack.c.h.b16 %v203
      %v249 = vunpack.c.l.b16 %v204
      %v250 = vunpack.c.h.b16 %v204
      %v251 = vunpack.c.l.b16 %v205
      %v252 = vunpack.c.h.b16 %v205
      %v253 = vunpack.c.l.b16 %v206
      %v254 = vunpack.c.h.b16 %v206
      %v255 = vpack.c.b16 %v241, %v239
      %v256 = vpack.c.b16 %v242, %v240
      %v257 = vpack.c.b16 %v245, %v243
      %v258 = vpack.c.b16 %v246, %v244
      %v259 = vpack.c.b16 %v249, %v247
      %v260 = vpack.c.b16 %v250, %v248
      %v261 = vpack.c.b16 %v253, %v251
      %v262 = vpack.c.b16 %v254, %v252
      %v291 = vunpack.c.l.b16 %v207
      %v292 = vunpack.c.h.b16 %v207
      %v293 = vunpack.c.l.b16 %v208
      %v294 = vunpack.c.h.b16 %v208
      %v295 = vunpack.c.l.b16 %v209
      %v296 = vunpack.c.h.b16 %v209
      %v297 = vunpack.c.l.b16 %v210
      %v298 = vunpack.c.h.b16 %v210
      %v299 = vunpack.c.l.b16 %v211
      %v300 = vunpack.c.h.b16 %v211
      %v301 = vunpack.c.l.b16 %v212
      %v302 = vunpack.c.h.b16 %v212
      %v303 = vunpack.c.l.b16 %v213
      %v304 = vunpack.c.h.b16 %v213
      %v305 = vunpack.c.l.b16 %v214
      %v306 = vunpack.c.h.b16 %v214
      %v307 = vunpack.c.l.b16 %v215
      %v308 = vunpack.c.h.b16 %v215
      %v309 = vunpack.c.l.b16 %v216
      %v310 = vunpack.c.h.b16 %v216
      %v311 = vunpack.c.l.b16 %v217
      %v312 = vunpack.c.h.b16 %v217
      %v313 = vunpack.c.l.b16 %v218
      %v314 = vunpack.c.h.b16 %v218
      %v315 = vunpack.c.l.b16 %v219
      %v316 = vunpack.c.h.b16 %v219
      %v317 = vunpack.c.l.b16 %v220
      %v318 = vunpack.c.h.b16 %v220
      %v319 = vunpack.c.l.b16 %v221
      %v320 = vunpack.c.h.b16 %v221
      %v321 = vunpack.c.l.b16 %v222
      %v322 = vunpack.c.h.b16 %v222
      %v323 = vunpack.c.l.b16 %v223
      %v324 = vunpack.c.h.b16 %v223
      %v325 = vunpack.c.l.b16 %v224
      %v326 = vunpack.c.h.b16 %v224
      %v327 = vunpack.c.l.b16 %v225
      %v328 = vunpack.c.h.b16 %v225
      %v329 = vunpack.c.l.b16 %v226
      %v330 = vunpack.c.h.b16 %v226
      %v331 = vunpack.c.l.b16 %v227
      %v332 = vunpack.c.h.b16 %v227
      %v333 = vunpack.c.l.b16 %v228
      %v334 = vunpack.c.h.b16 %v228
      %v335 = vunpack.c.l.b16 %v229
      %v336 = vunpack.c.h.b16 %v229
      %v337 = vunpack.c.l.b16 %v230
      %v338 = vunpack.c.h.b16 %v230
      %v339 = vpack.c.b16 %v293, %v291
      %v340 = vpack.c.b16 %v294, %v292
      %v341 = vpack.c.b16 %v297, %v295
      %v342 = vpack.c.b16 %v298, %v296
      %v343 = vpack.c.b16 %v301, %v299
      %v344 = vpack.c.b16 %v302, %v300
      %v345 = vpack.c.b16 %v305, %v303
      %v346 = vpack.c.b16 %v306, %v304
      %v347 = vpack.c.b16 %v309, %v307
      %v348 = vpack.c.b16 %v310, %v308
      %v349 = vpack.c.b16 %v313, %v311
      %v350 = vpack.c.b16 %v314, %v312
      %v351 = vpack.c.b16 %v317, %v315
      %v352 = vpack.c.b16 %v318, %v316
      %v353 = vpack.c.b16 %v321, %v319
      %v354 = vpack.c.b16 %v322, %v320
      %v355 = vpack.c.b16 %v325, %v323
      %v356 = vpack.c.b16 %v326, %v324
      %v357 = vpack.c.b16 %v329, %v327
      %v358 = vpack.c.b16 %v330, %v328
      %v359 = vpack.c.b16 %v333, %v331
      %v360 = vpack.c.b16 %v334, %v332
      %v361 = vpack.c.b16 %v337, %v335
      %v362 = vpack.c.b16 %v338, %v336
      %vm387 = vcmask 523264
      %v389 = vsel %vm387, %v256, 0
      %v392 = vsel %vm387, %v258, 0
      %v395 = vsel %vm387, %v260, 0
      %v398 = vsel %vm387, %v262, 0
      %400 = vmatprep.subr.bf16.mxu0 %v354
      %401 = vmatpush1.bf16.msra.mxu0 %v353
      %402 = vmatprep.subr.bf16.mxu0 %v352
      %403 = vmatpush1.bf16.msra.mxu0 %v351
      %404 = vmatprep.subr.bf16.mxu0 %v350
      %405 = vmatpush1.bf16.msra.mxu0 %v349
      %406 = vmatprep.subr.bf16.mxu0 %v348
      %407 = vmatpush1.bf16.msra.mxu0 %v347
      %408 = vmatprep.subr.bf16.mxu0 %v346
      %409 = vmatpush1.bf16.msra.mxu0 %v345
      %410 = vmatprep.subr.bf16.mxu0 %v344
      %411 = vmatpush1.bf16.msra.mxu0 %v343
      %412 = vmatprep.subr.bf16.mxu0 %v342
      %413 = vmatpush1.bf16.msra.mxu0 %v341
      %414 = vmatprep.subr.bf16.mxu0 %v340
      %415 = vmatpush1.bf16.msra.mxu0 %v339
      %416 = vmatprep.subr.bf16.mxu0 0
      %417 = vmatpush2.bf16.msra.mxu0 0
      %418 = vmatprep.subr.bf16.mxu0 0
      %419 = vmatpush2.bf16.msra.mxu0 0
      %420 = vmatprep.subr.bf16.mxu0 0
      %421 = vmatpush2.bf16.msra.mxu0 0
      %422 = vmatprep.subr.bf16.mxu0 0
      %423 = vmatpush2.bf16.msra.mxu0 0
      %424 = vmatprep.subr.bf16.mxu0 %v362
      %425 = vmatpush2.bf16.msra.mxu0 %v361
      %426 = vmatprep.subr.bf16.mxu0 %v360
      %427 = vmatpush2.bf16.msra.mxu0 %v359
      %428 = vmatprep.subr.bf16.mxu0 %v358
      %429 = vmatpush2.bf16.msra.mxu0 %v357
      %430 = vmatprep.subr.bf16.mxu0 %v356
      %431 = vmatpush2.bf16.msra.mxu0 %v355
      %432 = vmatprep.mubr.bf16.mxu0 %v389
      %433 = vmatmul.mubr.bf16.gmra.mxu0 %v255
      %v434 = vpop.f32.mrf.mxu0
      %v435 = vadd.f32 0.0, %v434
      %v436 = vpop.f32.mrf.mxu0
      %v437 = vadd.f32 0.0, %v436
      %v438 = vpop.f32.mrf.mxu0
      %v439 = vadd.f32 0.0, %v438
      %v440 = vpop.f32.mrf.mxu0
      %v441 = vadd.f32 0.0, %v440
      %442 = vmatprep.mubr.bf16.mxu0 %v392
      %443 = vmatmul.mubr.bf16.gmra.mxu0 %v257
      %v444 = vpop.f32.mrf.mxu0
      %v445 = vadd.f32 0.0, %v444
      %v446 = vpop.f32.mrf.mxu0
      %v447 = vadd.f32 0.0, %v446
      %v448 = vpop.f32.mrf.mxu0
      %v449 = vadd.f32 0.0, %v448
      %v450 = vpop.f32.mrf.mxu0
      %v451 = vadd.f32 0.0, %v450
      %452 = vmatprep.mubr.bf16.mxu0 %v395
      %453 = vmatmul.mubr.bf16.gmra.mxu0 %v259
      %v454 = vpop.f32.mrf.mxu0
      %v455 = vadd.f32 0.0, %v454
      %v456 = vpop.f32.mrf.mxu0
      %v457 = vadd.f32 0.0, %v456
      %v458 = vpop.f32.mrf.mxu0
      %v459 = vadd.f32 0.0, %v458
      %v460 = vpop.f32.mrf.mxu0
      %v461 = vadd.f32 0.0, %v460
      %462 = vmatprep.mubr.bf16.mxu0 %v398
      %463 = vmatmul.mubr.bf16.gmra.mxu0 %v261
      %v464 = vpop.f32.mrf.mxu0
      %v465 = vadd.f32 0.0, %v464
      %v466 = vpop.f32.mrf.mxu0
      %v467 = vadd.f32 0.0, %v466
      %v468 = vpop.f32.mrf.mxu0
      %v469 = vadd.f32 0.0, %v468
      %v470 = vpop.f32.mrf.mxu0
      %v471 = vadd.f32 0.0, %v470
      %472 = vdwg.mxu0
      %v473 = vld [vmem:[%s2] sm:$0xff]
      %v474 = vld [vmem:[%s2 + $0x8] sm:$0xff]
      %v475 = vld [vmem:[%s2 + $0x10] sm:$0xff]
      %v476 = vld [vmem:[%s2 + $0x18] sm:$0xff]
      %v477 = vadd.f32 %v435, %v473
      %v478 = vadd.f32 %v437, %v474
      %v479 = vadd.f32 %v439, %v475
      %v480 = vadd.f32 %v441, %v476
      %v481 = vadd.f32 %v445, %v473
      %v482 = vadd.f32 %v447, %v474
      %v483 = vadd.f32 %v449, %v475
      %v484 = vadd.f32 %v451, %v476
      %v485 = vadd.f32 %v455, %v473
      %v486 = vadd.f32 %v457, %v474
      %v487 = vadd.f32 %v459, %v475
      %v488 = vadd.f32 %v461, %v476
      %v489 = vadd.f32 %v465, %v473
      %v490 = vadd.f32 %v467, %v474
      %v491 = vadd.f32 %v469, %v475
      %v492 = vadd.f32 %v471, %v476
      %vm509 = vcmask 1040384
      %v510 = vrot.slane %v477, 7
      %v511 = vrot.slane %v478, 7
      %v512 = vrot.slane %v479, 7
      %v513 = vsel %vm509, %v510, %v512
      %v514 = vrot.slane %v480, 7
      %v515 = vsel %vm509, %v511, %v514
      %v516 = vrot.slane %v481, 7
      %v517 = vrot.slane %v482, 7
      %v518 = vrot.slane %v483, 7
      %v519 = vsel %vm509, %v516, %v518
      %v520 = vrot.slane %v484, 7
      %v521 = vsel %vm509, %v517, %v520
      %v522 = vrot.slane %v485, 7
      %v523 = vrot.slane %v486, 7
      %v524 = vrot.slane %v487, 7
      %v525 = vsel %vm509, %v522, %v524
      %v526 = vrot.slane %v488, 7
      %v527 = vsel %vm509, %v523, %v526
      %v528 = vrot.slane %v489, 7
      %v529 = vrot.slane %v490, 7
      %v530 = vrot.slane %v491, 7
      %v531 = vsel %vm509, %v528, %v530
      %v532 = vrot.slane %v492, 7
      %v533 = vsel %vm509, %v529, %v532
      %558 = vst [vmem:[%s197] sm:$0xfe] %v510
      %vm559 = vcmask 523265
      %560 = vst.msk [vmem:[%s197 + $0x8] sm:$0xfe] %vm559, %v511
      %561 = vst [vmem:[%s197 + $0x10] sm:$0xff] %v513
      %562 = vst.msk [vmem:[%s197 + $0x18] sm:$0xff] %vm387, %v515
      %563 = vst [vmem:[%s197 + $0x20] sm:$0x1] %v512
      %vm564 = vcmask 516096
      %565 = vst.msk [vmem:[%s197 + $0x28] sm:$0x1] %vm564, %v514
      %566 = vst [vmem:[%s197 + $0x30] sm:$0xfe] %v516
      %567 = vst.msk [vmem:[%s197 + $0x38] sm:$0xfe] %vm559, %v517
      %568 = vst [vmem:[%s197 + $0x40] sm:$0xff] %v519
      %569 = vst.msk [vmem:[%s197 + $0x48] sm:$0xff] %vm387, %v521
      %570 = vst [vmem:[%s197 + $0x50] sm:$0x1] %v518
      %571 = vst.msk [vmem:[%s197 + $0x58] sm:$0x1] %vm564, %v520
      %572 = vst [vmem:[%s197 + $0x60] sm:$0xfe] %v522
      %573 = vst.msk [vmem:[%s197 + $0x68] sm:$0xfe] %vm559, %v523
      %574 = vst [vmem:[%s197 + $0x70] sm:$0xff] %v525
      %575 = vst.msk [vmem:[%s197 + $0x78] sm:$0xff] %vm387, %v527
      %576 = vst [vmem:[%s197 + $0x80] sm:$0x1] %v524
      %577 = vst.msk [vmem:[%s197 + $0x88] sm:$0x1] %vm564, %v526
      %578 = vst [vmem:[%s197 + $0x90] sm:$0xfe] %v528
      %579 = vst.msk [vmem:[%s197 + $0x98] sm:$0xfe] %vm559, %v529
      %580 = vst [vmem:[%s197 + $0xa0] sm:$0xff] %v531
      %581 = vst.msk [vmem:[%s197 + $0xa8] sm:$0xff] %vm387, %v533
      %582 = vst [vmem:[%s197 + $0xb0] sm:$0x1] %v530
      %583 = vst.msk [vmem:[%s197 + $0xb8] sm:$0x1] %vm564, %v532
      %v584 = vld [vmem:[%s3] sm:$0x3]
      %v585 = vlaneseq
      %vm586 = vcmp.ge.s32.totalorder %v585, 0
      %vm587 = vcmp.lt.s32.totalorder %v585, 192
      %vm588 = vmand %vm586, %vm587
      %589 = vst.msk [vmem:[%s197] ss:$8 sm:$0x3] %vm588, %v584
      %590 = vst.msk [vmem:[%s197] ss:$8 sm:$0x0] %vm588, %v584
      %s591 = scalar_lea.vmem %s197, 48
      %592 = vst.msk [vmem:[%s591] ss:$8 sm:$0x3] %vm588, %v584
      %593 = vst.msk [vmem:[%s591] ss:$8 sm:$0x0] %vm588, %v584
      %s594 = scalar_lea.vmem %s197, 96
      %595 = vst.msk [vmem:[%s594] ss:$8 sm:$0x3] %vm588, %v584
      %596 = vst.msk [vmem:[%s594] ss:$8 sm:$0x0] %vm588, %v584
      %s597 = scalar_lea.vmem %s197, 144
      %598 = vst.msk [vmem:[%s597] ss:$8 sm:$0x3] %vm588, %v584
      %599 = vst.msk [vmem:[%s597] ss:$8 sm:$0x0] %vm588, %v584
      %p600 = scmp.lt.s32.totalorder %s15, 1
      %s601 = scalar_select %p600, %s15, 1
      %s602 = smul.addr %s601, 24
      %s603 = smul.addr %s602, 8
      %s604 = scalar_lea.vmem %s4, %s603
      // Predicated region
      $region37: #{patch_embedding.1} parent=35 // pred_check
        %p605 = pneg %p122
      $region38: #{patch_embedding.1} parent=35 // pred_check_branch
        %607 = sbr.rel (%p605) target = $region40
      $region39: #{patch_embedding.1} parent=35 // pred_region
        _
      $region40: #{patch_embedding.1} parent=35 // pred_fallthru
        _
    $region36: #{patch_embedding.1} parent=5 // pred_fallthru
      _
    %p608 = scmp.le.s32.totalorder 2, %s10
    // Predicated region
    $region41: #{patch_embedding.1} parent=5 // pred_check
      %p609 = pneg %p608
    $region42: #{patch_embedding.1} parent=5 // pred_check_branch
      %611 = sbr.rel (%p609) target = $region44
    $region43: #{patch_embedding.1} parent=5 // pred_region
      %s612 = ssub.s32 %s10, 2
      // Predicated region
      $region45: #{patch_embedding.1} parent=43 // pred_check
        %p613 = pneg %p128
      $region46: #{patch_embedding.1} parent=43 // pred_check_branch
        %615 = sbr.rel (%p613) target = $region48
      $region47: #{patch_embedding.1} parent=43 // pred_region
        %p616 = scmp.lt.s32.totalorder %s16, 1
        %s617 = scalar_select %p616, %s16, 1
        %s618 = smul.addr %s617, 24
        %s619 = smul.addr %s618, 8
        %s620 = scalar_lea.vmem %s4, %s619
      $region48: #{patch_embedding.1} parent=43 // pred_fallthru
        _
    $region44: #{patch_embedding.1} parent=5 // pred_fallthru
      _
  $region6: #{patch_embedding.1} parent=0 // loop_footer
    %s14 = sadd.s32 1, %s10
  $region7: #{patch_embedding.1} parent=0 // loop_footer_branch
    %9 = sbr.rel target = $region3
  $region8: #{patch_embedding.1} parent=0 // loop_exit
    _

</llo_original>
